<compile_context>
chip_gen: v5e
topology: v5e:2x2
jax: 0.10.0
libtpu: 0.0.40
codegen_flags: <defaults>
</compile_context>

<pallas_src>
import functools

import jax
import jax.numpy as jnp
import numpy as np
from jax.experimental import pallas as pl
from jax.experimental.pallas import tpu as pltpu


def _dense_connect_kernel(x_ref, scale_ref, shift_ref, b_ref, y_ref, lhs_ref,
                          *, images_per_tile, rows_per_image):
    # x_ref:     (rows, W*C)    f32   batch-tile of NHWC rows, (w, c) on lanes
    # scale_ref: (1, W*C)       f32   fused BN scale = gamma/sqrt(var+eps)
    # shift_ref: (1, W*C)       f32   fused BN shift = beta - mean*scale
    # b_ref:     (3*W*C, W*G)   bf16  dy-stacked Toeplitz conv weights
    # y_ref:     (rows, W*G)    f32   conv output (lane-dense, 128 lanes here)
    # lhs_ref:   (rows, 3*W*C)  f32   scratch: im2col-along-H LHS bands
    h = rows_per_image
    wc = x_ref.shape[1]

    # Fused inference BatchNorm + ReLU over the whole batch tile (lane-dense).
    act = jnp.maximum(x_ref[...] * scale_ref[...] + shift_ref[...], 0.0)

    zero_row = jnp.zeros((1, wc), lhs_ref.dtype)
    for b in range(images_per_tile):                   # static; tiny trip count
        r0 = b * h
        blk = act[r0:r0 + h, :]                        # (H, W*C) for image b
        # Band layout of the LHS: columns [dy*WC:(dy+1)*WC] hold activation row
        # (h + dy - 1); zero outside the image (padding=1 along H).
        lhs_ref[r0:r0 + h, wc:2 * wc] = blk                      # dy = 1 (center)
        lhs_ref[r0 + 1:r0 + h, 0:wc] = blk[0:h - 1, :]           # dy = 0 (row above)
        lhs_ref[r0:r0 + 1, 0:wc] = zero_row                      # top halo
        lhs_ref[r0:r0 + h - 1, 2 * wc:3 * wc] = blk[1:h, :]      # dy = 2 (row below)
        lhs_ref[r0 + h - 1:r0 + h, 2 * wc:3 * wc] = zero_row     # bottom halo

    # Single MXU matmul: (rows, 3*W*C) @ (3*W*C, W*G), bf16 operands,
    # f32 accumulation, full-width unmasked store of the lane-dense output.
    y_ref[...] = jnp.dot(lhs_ref[...].astype(jnp.bfloat16), b_ref[...],
                         preferred_element_type=jnp.float32)


def _build_toeplitz_weights(weight, W):
    """(G, C, 3, 3) OIHW conv weights -> (3*W*C, W*G) dy-stacked Toeplitz matrix.

    B[dy*W*C + w'*C + c, w*G + g] = weight[g, c, dy, w' - w + 1] if 0 <= w'-w+1 <= 2
                                  = 0  otherwise (zero pad along W)
    Horizontal taps (dx) and the W-padding are folded into the matrix; vertical
    taps (dy) are stacked along K so the whole 3x3xC contraction is one matmul.
    """
    G, C, _, _ = weight.shape
    wt = jnp.transpose(weight, (2, 3, 1, 0))                 # wt[ky, kx, c, g]
    wp = jnp.arange(W)[:, None]                              # input column  w'
    wo = jnp.arange(W)[None, :]                              # output column w
    dx = wp - wo + 1                                         # kx = w' - w + 1
    valid = ((dx >= 0) & (dx < 3)).astype(weight.dtype)      # zero pad along W
    t = wt[:, jnp.clip(dx, 0, 2), :, :]                      # (3, W, W, C, G)
    t = t * valid[None, :, :, None, None]
    t = jnp.transpose(t, (0, 1, 3, 2, 4))                    # (ky, w', c, w, g)
    return t.reshape(3 * W * C, W * G)


def _default_batch_tiles(n):
    # v7x has 2 TensorCores per chip: keep a 2-step "parallel" grid so each TC
    # gets a batch tile.  Single-TC v5e/v6e: collapse to one step (one
    # (N*H, 3*W*C) matmul) to avoid the ~0.35 us/step fixed grid overhead.
    try:
        kind = jax.devices()[0].device_kind.lower()
    except Exception:
        kind = ""
    if n >= 2 and n % 2 == 0 and ("v7" in kind or "7x" in kind):
        return 2
    return 1


def dense_connect_layer_standard_nhwc(x_nhwc, params, eps=1e-5, batch_tiles=None):
    """NHWC-native Pallas implementation of DenseConnectLayerStandard.forward
    (bottleneck=False).  No layout transposes: only free reshapes + one concat."""
    gamma, beta, mean, var, weight = params                  # weight: (G, C, 3, 3) OIHW
    N, H, W, C = x_nhwc.shape
    G = weight.shape[0]
    WC, WG = W * C, W * G

    if batch_tiles is None:
        batch_tiles = _default_batch_tiles(N)
    assert N % batch_tiles == 0, "batch_tiles must divide N"
    images_per_tile = N // batch_tiles
    rows_per_tile = images_per_tile * H

    # Fold BN into a per-channel affine, tiled onto the (w, c) lane layout.
    scale = (gamma / jnp.sqrt(var + eps)).astype(jnp.float32)            # (C,)
    shift = (beta - mean * scale).astype(jnp.float32)                    # (C,)
    scale_row = jnp.tile(scale, W).reshape(1, WC)
    shift_row = jnp.tile(shift, W).reshape(1, WC)

    # Matmul-ready conv weights, dy-stacked along K, bf16 MXU operands.
    b = _build_toeplitz_weights(weight.astype(jnp.float32), W).astype(jnp.bfloat16)

    # Free reshape: (N, H, W, C) -> (N*H, W*C) rows (batch folded into M).
    x_rows = x_nhwc.astype(jnp.float32).reshape(N * H, WC)

    kernel = functools.partial(_dense_connect_kernel,
                               images_per_tile=images_per_tile,
                               rows_per_image=H)

    y_rows = pl.pallas_call(
        kernel,
        out_shape=jax.ShapeDtypeStruct((N * H, WG), jnp.float32),
        grid_spec=pltpu.PrefetchScalarGridSpec(
            num_scalar_prefetch=0,
            grid=(batch_tiles,),
            in_specs=[
                pl.BlockSpec((rows_per_tile, WC), lambda t: (t, 0)),
                # Grid-invariant inputs below; at larger W*C request single
                # buffering via pipeline_mode=pl.Buffered(1) (trivial here).
                pl.BlockSpec((1, WC), lambda t: (0, 0)),
                pl.BlockSpec((1, WC), lambda t: (0, 0)),
                pl.BlockSpec((3 * WC, WG), lambda t: (0, 0)),
            ],
            out_specs=pl.BlockSpec((rows_per_tile, WG), lambda t: (t, 0)),
            scratch_shapes=[pltpu.VMEM((rows_per_tile, 3 * WC), jnp.float32)],
        ),
        compiler_params=pltpu.CompilerParams(
            dimension_semantics=("parallel",)),
    )(x_rows, scale_row, shift_row, b)

    y_nhwc = y_rows.reshape(N, H, W, G)
    # torch.cat([x, self.net(x)], channel_axis)  (channel-last here)
    return jnp.concatenate([x_nhwc, y_nhwc], axis=-1)


def dense_connect_layer_standard(x_nchw, params, eps=1e-5, batch_tiles=None):
    """PyTorch-API (NCHW) entry point.  The two transposes are boundary glue
    only — an NHWC end-to-end network should call
    dense_connect_layer_standard_nhwc directly and skip them."""
    x_nhwc = jnp.transpose(x_nchw, (0, 2, 3, 1))
    out_nhwc = dense_connect_layer_standard_nhwc(x_nhwc, params, eps=eps,
                                                 batch_tiles=batch_tiles)
    return jnp.transpose(out_nhwc, (0, 3, 1, 2))


def _reference(x_nchw, params, eps=1e-5):
    """Pure-JAX reference mirroring the PyTorch forward (eval-mode BN)."""
    gamma, beta, mean, var, weight = params
    inv = 1.0 / jnp.sqrt(var + eps)
    xn = (x_nchw - mean[None, :, None, None]) * inv[None, :, None, None]
    act = jnp.maximum(xn * gamma[None, :, None, None] + beta[None, :, None, None], 0.0)
    conv = jax.lax.conv_general_dilated(
        act, weight, window_strides=(1, 1), padding=((1, 1), (1, 1)),
        dimension_numbers=('NCHW', 'OIHW', 'NCHW'),
        precision=jax.lax.Precision.HIGHEST)
    return jnp.concatenate([x_nchw, conv], axis=1)


if __name__ == "__main__":
    N, C, H, W = 2, 4, 16, 16
    growth_rate = 8
    opt = {'bottleneck': False, 'growthRate': growth_rate, 'dropRate': 0.0}

    key = jax.random.PRNGKey(0)
    k1, k2, k3, k4, k5, k6 = jax.random.split(key, 6)
    x = jax.random.normal(k1, (N, C, H, W), dtype=jnp.float32)

    # Deterministic synthetic parameters (shapes per nn.BatchNorm2d / nn.Conv2d).
    gamma = 1.0 + 0.1 * jax.random.normal(k2, (C,), dtype=jnp.float32)
    beta = 0.1 * jax.random.normal(k3, (C,), dtype=jnp.float32)
    running_mean = 0.05 * jax.random.normal(k4, (C,), dtype=jnp.float32)
    running_var = jnp.abs(1.0 + 0.1 * jax.random.normal(k5, (C,), dtype=jnp.float32))
    conv_weight = 0.1 * jax.random.normal(k6, (growth_rate, C, 3, 3), dtype=jnp.float32)
    params = (gamma, beta, running_mean, running_var, conv_weight)

    fwd = jax.jit(dense_connect_layer_standard)
    out = fwd(x, params)
    out = jax.block_until_ready(out)

    ref = _reference(x, params)
    assert out.shape == (N, C + growth_rate, H, W)
    # Tolerance accounts for the deliberate bf16 MXU-operand choice (per perf
    # review) vs. the f32 HIGHEST-precision reference conv: bf16 operand
    # rounding over a 36-term contraction gives ~1e-2-level worst-case error.
    np.testing.assert_allclose(np.asarray(out), np.asarray(ref), rtol=1e-2, atol=1e-2)
    print("KERNEL_OK")
</pallas_src>

<mosaic_0001>
module attributes {stable_mosaic.version = 11 : i64} {
  func.func @_dense_connect_kernel(%arg0: i32, %arg1: memref<32x64xf32, #tpu.memory_space<vmem>>, %arg2: memref<1x64xf32, #tpu.memory_space<vmem>>, %arg3: memref<1x64xf32, #tpu.memory_space<vmem>>, %arg4: memref<192x128xbf16, #tpu.memory_space<vmem>>, %arg5: memref<32x128xf32, #tpu.memory_space<vmem>>, %arg6: memref<32x192xf32, #tpu.memory_space<vmem>>) attributes {dimension_semantics = [#tpu.dimension_semantics<parallel>], iteration_bounds = array<i64: 1>, scalar_prefetch = 0 : i64, scratch_operands = 1 : i64, tpu.core_type = #tpu.core_type<tc>, window_params = [{transform_indices = @transform_0, window_bounds = array<i64: 32, 64>}, {pipeline_mode = #tpu.pipeline_mode<synchronous>, transform_indices = @transform_1, window_bounds = array<i64: 1, 64>}, {pipeline_mode = #tpu.pipeline_mode<synchronous>, transform_indices = @transform_2, window_bounds = array<i64: 1, 64>}, {pipeline_mode = #tpu.pipeline_mode<synchronous>, transform_indices = @transform_3, window_bounds = array<i64: 192, 128>}, {transform_indices = @transform_4, window_bounds = array<i64: 32, 128>}]} {
    %c0 = arith.constant 0 : index
    %c0_0 = arith.constant 0 : index
    %0 = vector.load %arg1[%c0, %c0_0] : memref<32x64xf32, #tpu.memory_space<vmem>>, vector<32x64xf32>
    %c0_1 = arith.constant 0 : index
    %c0_2 = arith.constant 0 : index
    %1 = vector.load %arg2[%c0_1, %c0_2] : memref<1x64xf32, #tpu.memory_space<vmem>>, vector<1x64xf32>
    %2 = vector.broadcast %1 : vector<1x64xf32> to vector<32x64xf32>
    %3 = arith.mulf %0, %2 : vector<32x64xf32>
    %c0_3 = arith.constant 0 : index
    %c0_4 = arith.constant 0 : index
    %4 = vector.load %arg3[%c0_3, %c0_4] : memref<1x64xf32, #tpu.memory_space<vmem>>, vector<1x64xf32>
    %5 = vector.broadcast %4 : vector<1x64xf32> to vector<32x64xf32>
    %6 = arith.addf %3, %5 : vector<32x64xf32>
    %cst = arith.constant 0.000000e+00 : f32
    %7 = vector.broadcast %cst : f32 to vector<32x64xf32>
    %8 = arith.maximumf %6, %7 : vector<32x64xf32>
    %cst_5 = arith.constant 0.000000e+00 : f32
    %9 = vector.broadcast %cst_5 : f32 to vector<1x64xf32>
    %10 = vector.extract_strided_slice %8 {offsets = [0, 0], sizes = [16, 64], strides = [1, 1]} : vector<32x64xf32> to vector<16x64xf32>
    %c0_6 = arith.constant 0 : index
    %c64 = arith.constant 64 : index
    %11 = vector.load %arg6[%c0_6, %c64] : memref<32x192xf32, #tpu.memory_space<vmem>>, vector<16x64xf32>
    tpu.vector_store %arg6[%c0_6, %c64], %10 {strides = array<i32>} : memref<32x192xf32, #tpu.memory_space<vmem>>, vector<16x64xf32>,
    %12 = vector.extract_strided_slice %10 {offsets = [0, 0], sizes = [15, 64], strides = [1, 1]} : vector<16x64xf32> to vector<15x64xf32>
    %c1 = arith.constant 1 : index
    %c0_7 = arith.constant 0 : index
    %13 = vector.load %arg6[%c1, %c0_7] : memref<32x192xf32, #tpu.memory_space<vmem>>, vector<15x64xf32>
    tpu.vector_store %arg6[%c1, %c0_7], %12 {strides = array<i32>} : memref<32x192xf32, #tpu.memory_space<vmem>>, vector<15x64xf32>,
    %c0_8 = arith.constant 0 : index
    %c0_9 = arith.constant 0 : index
    %14 = vector.load %arg6[%c0_8, %c0_9] : memref<32x192xf32, #tpu.memory_space<vmem>>, vector<1x64xf32>
    tpu.vector_store %arg6[%c0_8, %c0_9], %9 {strides = array<i32>} : memref<32x192xf32, #tpu.memory_space<vmem>>, vector<1x64xf32>,
    %15 = vector.extract_strided_slice %10 {offsets = [1, 0], sizes = [15, 64], strides = [1, 1]} : vector<16x64xf32> to vector<15x64xf32>
    %c0_10 = arith.constant 0 : index
    %c128 = arith.constant 128 : index
    %16 = vector.load %arg6[%c0_10, %c128] : memref<32x192xf32, #tpu.memory_space<vmem>>, vector<15x64xf32>
    tpu.vector_store %arg6[%c0_10, %c128], %15 {strides = array<i32>} : memref<32x192xf32, #tpu.memory_space<vmem>>, vector<15x64xf32>,
    %c15 = arith.constant 15 : index
    %c128_11 = arith.constant 128 : index
    %17 = vector.load %arg6[%c15, %c128_11] : memref<32x192xf32, #tpu.memory_space<vmem>>, vector<1x64xf32>
    tpu.vector_store %arg6[%c15, %c128_11], %9 {strides = array<i32>} : memref<32x192xf32, #tpu.memory_space<vmem>>, vector<1x64xf32>,
    %18 = vector.extract_strided_slice %8 {offsets = [16, 0], sizes = [16, 64], strides = [1, 1]} : vector<32x64xf32> to vector<16x64xf32>
    %c16 = arith.constant 16 : index
    %c64_12 = arith.constant 64 : index
    %19 = vector.load %arg6[%c16, %c64_12] : memref<32x192xf32, #tpu.memory_space<vmem>>, vector<16x64xf32>
    tpu.vector_store %arg6[%c16, %c64_12], %18 {strides = array<i32>} : memref<32x192xf32, #tpu.memory_space<vmem>>, vector<16x64xf32>,
    %20 = vector.extract_strided_slice %18 {offsets = [0, 0], sizes = [15, 64], strides = [1, 1]} : vector<16x64xf32> to vector<15x64xf32>
    %c17 = arith.constant 17 : index
    %c0_13 = arith.constant 0 : index
    %21 = vector.load %arg6[%c17, %c0_13] : memref<32x192xf32, #tpu.memory_space<vmem>>, vector<15x64xf32>
    tpu.vector_store %arg6[%c17, %c0_13], %20 {strides = array<i32>} : memref<32x192xf32, #tpu.memory_space<vmem>>, vector<15x64xf32>,
    %c16_14 = arith.constant 16 : index
    %c0_15 = arith.constant 0 : index
    %22 = vector.load %arg6[%c16_14, %c0_15] : memref<32x192xf32, #tpu.memory_space<vmem>>, vector<1x64xf32>
    tpu.vector_store %arg6[%c16_14, %c0_15], %9 {strides = array<i32>} : memref<32x192xf32, #tpu.memory_space<vmem>>, vector<1x64xf32>,
    %23 = vector.extract_strided_slice %18 {offsets = [1, 0], sizes = [15, 64], strides = [1, 1]} : vector<16x64xf32> to vector<15x64xf32>
    %c16_16 = arith.constant 16 : index
    %c128_17 = arith.constant 128 : index
    %24 = vector.load %arg6[%c16_16, %c128_17] : memref<32x192xf32, #tpu.memory_space<vmem>>, vector<15x64xf32>
    tpu.vector_store %arg6[%c16_16, %c128_17], %23 {strides = array<i32>} : memref<32x192xf32, #tpu.memory_space<vmem>>, vector<15x64xf32>,
    %c31 = arith.constant 31 : index
    %c128_18 = arith.constant 128 : index
    %25 = vector.load %arg6[%c31, %c128_18] : memref<32x192xf32, #tpu.memory_space<vmem>>, vector<1x64xf32>
    tpu.vector_store %arg6[%c31, %c128_18], %9 {strides = array<i32>} : memref<32x192xf32, #tpu.memory_space<vmem>>, vector<1x64xf32>,
    %c0_19 = arith.constant 0 : index
    %c0_20 = arith.constant 0 : index
    %26 = vector.load %arg6[%c0_19, %c0_20] : memref<32x192xf32, #tpu.memory_space<vmem>>, vector<32x192xf32>
    %27 = arith.truncf %26 : vector<32x192xf32> to vector<32x192xbf16>
    %c0_21 = arith.constant 0 : index
    %c0_22 = arith.constant 0 : index
    %28 = vector.load %arg4[%c0_21, %c0_22] : memref<192x128xbf16, #tpu.memory_space<vmem>>, vector<192x128xbf16>
    %cst_23 = arith.constant dense<0.000000e+00> : vector<32x128xf32>
    %29 = tpu.matmul %27, %28, %cst_23 {dimension_numbers = #tpu.dot_dimension_numbers<[1], [0], [0], [1], [0, 0, 1, 1], [], []>} : vector<32x192xbf16>, vector<192x128xbf16>, vector<32x128xf32> -> vector<32x128xf32>
    %c0_24 = arith.constant 0 : index
    %c0_25 = arith.constant 0 : index
    %30 = vector.load %arg5[%c0_24, %c0_25] : memref<32x128xf32, #tpu.memory_space<vmem>>, vector<32x128xf32>
    tpu.vector_store %arg5[%c0_24, %c0_25], %29 {strides = array<i32>} : memref<32x128xf32, #tpu.memory_space<vmem>>, vector<32x128xf32>,
    return
  }
  func.func @transform_0(%arg0: i32) -> (i32, i32) {
    %c0_i32 = arith.constant 0 : i32
    %c0_i32_0 = arith.constant 0 : i32
    return %arg0, %c0_i32 : i32, i32
  }
  func.func @transform_1(%arg0: i32) -> (i32, i32) {
    %c0_i32 = arith.constant 0 : i32
    %c0_i32_0 = arith.constant 0 : i32
    %c0_i32_1 = arith.constant 0 : i32
    return %c0_i32, %c0_i32_0 : i32, i32
  }
  func.func @transform_2(%arg0: i32) -> (i32, i32) {
    %c0_i32 = arith.constant 0 : i32
    %c0_i32_0 = arith.constant 0 : i32
    %c0_i32_1 = arith.constant 0 : i32
    return %c0_i32, %c0_i32_0 : i32, i32
  }
  func.func @transform_3(%arg0: i32) -> (i32, i32) {
    %c0_i32 = arith.constant 0 : i32
    %c0_i32_0 = arith.constant 0 : i32
    %c0_i32_1 = arith.constant 0 : i32
    return %c0_i32, %c0_i32_0 : i32, i32
  }
  func.func @transform_4(%arg0: i32) -> (i32, i32) {
    %c0_i32 = arith.constant 0 : i32
    %c0_i32_0 = arith.constant 0 : i32
    return %arg0, %c0_i32 : i32, i32
  }
}

</mosaic_0001>

<llo_original>
// kernel: tile.18
$region0: #{tile.18}
  #allocation0 [shape = 's32[1]{0}', space=sflag, size = 0x4, scoped, tag = 'scoped memory for tile.18']
  %s0 = inlined_call_operand.vmem [shape: f32[4], index: 0, kind: input, shape index: {}]
  %s1 = inlined_call_operand.vmem [shape: f32[16,4], index: 1, kind: output, shape index: {}]
  // Predicated region
  $region2: #{tile.18} parent=0 // pred_check
    _
  $region3: #{tile.18} parent=0 // pred_check_branch
    %3 = sbr.rel (0) target = $region5
  $region4: #{tile.18} parent=0 // pred_region
    _
  $region5: #{tile.18} parent=0 // pred_fallthru
    _
  %v4 = vld [vmem:[%s0] ss:$0 sm:$0xff]
  %5 = vst [vmem:[%s1] sm:$0xff] %v4
  %s6 = scalar_lea.vmem %s1, 8
  %7 = vst [vmem:[%s6] sm:$0xff] %v4

// kernel: tile.19
$region0: #{tile.19}
  %s0 = inlined_call_operand.vmem [shape: f32[16,4], index: 0, kind: input, shape index: {}]
  %s1 = inlined_call_operand.vmem [shape: f32[1,64], index: 1, kind: output, shape index: {}]
  $region1: #{tile.19} parent=0
    #allocation0 [shape = 'u8[4096]{0}', space=vmem, size = 0x1000, scoped, tag = 'scoped mem for output reshape']
    %v2 = vld [vmem:[%s0] sm:$0x1]
    %vm3 = vcmask 31744
    %4 = vst.msk [vmem:[#allocation0] sm:$0x1] %vm3, %v2
    %s5 = scalar_lea.vmem %s0, 15
    %v6 = vld [vmem:[%s5] sm:$0x1]
    %7 = vrot.lane.b32.xlu0 %v6, 60
    %v8 = vpop.permute.xlu0 %7
    %vm9 = vcmask 523744
    %10 = vst.msk [vmem:[#allocation0] sm:$0x1] %vm9, %v8
    %s11 = scalar_lea.vmem %s0, 14
    %v12 = vld [vmem:[%s11] sm:$0x1]
    %13 = vrot.lane.b32.xlu0 %v12, 56
    %v14 = vpop.permute.xlu0 %13
    %vm15 = vcmask 490944
    %16 = vst.msk [vmem:[#allocation0] sm:$0x1] %vm15, %v14
    %s17 = scalar_lea.vmem %s0, 13
    %v18 = vld [vmem:[%s17] sm:$0x1]
    %19 = vrot.lane.b32.xlu0 %v18, 52
    %v20 = vpop.permute.xlu0 %19
    %vm21 = vcmask 458144
    %22 = vst.msk [vmem:[#allocation0] sm:$0x1] %vm21, %v20
    %s23 = scalar_lea.vmem %s0, 12
    %v24 = vld [vmem:[%s23] sm:$0x1]
    %25 = vrot.lane.b32.xlu0 %v24, 48
    %v26 = vpop.permute.xlu0 %25
    %vm27 = vcmask 425344
    %28 = vst.msk [vmem:[#allocation0] sm:$0x1] %vm27, %v26
    %s29 = scalar_lea.vmem %s0, 11
    %v30 = vld [vmem:[%s29] sm:$0x1]
    %31 = vrot.lane.b32.xlu0 %v30, 44
    %v32 = vpop.permute.xlu0 %31
    %vm33 = vcmask 392544
    %34 = vst.msk [vmem:[#allocation0] sm:$0x1] %vm33, %v32
    %s35 = scalar_lea.vmem %s0, 10
    %v36 = vld [vmem:[%s35] sm:$0x1]
    %37 = vrot.lane.b32.xlu0 %v36, 40
    %v38 = vpop.permute.xlu0 %37
    %vm39 = vcmask 359744
    %40 = vst.msk [vmem:[#allocation0] sm:$0x1] %vm39, %v38
    %s41 = scalar_lea.vmem %s0, 9
    %v42 = vld [vmem:[%s41] sm:$0x1]
    %43 = vrot.lane.b32.xlu0 %v42, 36
    %v44 = vpop.permute.xlu0 %43
    %vm45 = vcmask 326944
    %46 = vst.msk [vmem:[#allocation0] sm:$0x1] %vm45, %v44
    %s47 = scalar_lea.vmem %s0, 8
    %v48 = vld [vmem:[%s47] sm:$0x1]
    %49 = vrot.lane.b32.xlu0 %v48, 32
    %v50 = vpop.permute.xlu0 %49
    %vm51 = vcmask 294144
    %52 = vst.msk [vmem:[#allocation0] sm:$0x1] %vm51, %v50
    %s53 = scalar_lea.vmem %s0, 7
    %v54 = vld [vmem:[%s53] sm:$0x1]
    %55 = vrot.lane.b32.xlu0 %v54, 28
    %v56 = vpop.permute.xlu0 %55
    %vm57 = vcmask 261344
    %58 = vst.msk [vmem:[#allocation0] sm:$0x1] %vm57, %v56
    %s59 = scalar_lea.vmem %s0, 6
    %v60 = vld [vmem:[%s59] sm:$0x1]
    %61 = vrot.lane.b32.xlu0 %v60, 24
    %v62 = vpop.permute.xlu0 %61
    %vm63 = vcmask 228544
    %64 = vst.msk [vmem:[#allocation0] sm:$0x1] %vm63, %v62
    %s65 = scalar_lea.vmem %s0, 5
    %v66 = vld [vmem:[%s65] sm:$0x1]
    %67 = vrot.lane.b32.xlu0 %v66, 20
    %v68 = vpop.permute.xlu0 %67
    %vm69 = vcmask 195744
    %70 = vst.msk [vmem:[#allocation0] sm:$0x1] %vm69, %v68
    %s71 = scalar_lea.vmem %s0, 4
    %v72 = vld [vmem:[%s71] sm:$0x1]
    %73 = vrot.lane.b32.xlu0 %v72, 16
    %v74 = vpop.permute.xlu0 %73
    %vm75 = vcmask 162944
    %76 = vst.msk [vmem:[#allocation0] sm:$0x1] %vm75, %v74
    %s77 = scalar_lea.vmem %s0, 3
    %v78 = vld [vmem:[%s77] sm:$0x1]
    %79 = vrot.lane.b32.xlu0 %v78, 12
    %v80 = vpop.permute.xlu0 %79
    %vm81 = vcmask 130144
    %82 = vst.msk [vmem:[#allocation0] sm:$0x1] %vm81, %v80
    %s83 = scalar_lea.vmem %s0, 2
    %v84 = vld [vmem:[%s83] sm:$0x1]
    %85 = vrot.lane.b32.xlu0 %v84, 8
    %v86 = vpop.permute.xlu0 %85
    %vm87 = vcmask 97344
    %88 = vst.msk [vmem:[#allocation0] sm:$0x1] %vm87, %v86
    %s89 = scalar_lea.vmem %s0, 1
    %v90 = vld [vmem:[%s89] sm:$0x1]
    %91 = vrot.lane.b32.xlu0 %v90, 4
    %v92 = vpop.permute.xlu0 %91
    %vm93 = vcmask 64544
    %94 = vst.msk [vmem:[#allocation0] sm:$0x1] %vm93, %v92
    %s96 = ssub.s32 2, 1
    %v97 = vld [vmem:[#allocation0] sm:%s96]
    %s99 = ssub.s32 2, 1
    %100 = vst [vmem:[%s1] sm:%s99] %v97

// kernel: dense_connect_layer_standard.1
$region0: #{dense_connect_layer_standard.1}
  #allocation0 [shape = 'u32[]', space=smem, size = 0x4, offset = 0x4, fixed_abs, tag = 'smem constant byte address 0x4 - core index']
  #allocation1 [shape = 'u32[72,128]{1,0:T(1,128)}', space=vmem, size = 0x9000, scoped, tag = 'internal scratch']
  #allocation2 [shape = 'f32[32,192]{1,0:T(8,128)}', space=vmem, size = 0x8000, scoped, tag = 'scratch operand']
  %s0 = inlined_call_operand.vmem [shape: f32[32,64], index: 0, kind: input, shape index: {}]
  %s1 = inlined_call_operand.vmem [shape: f32[1,64], index: 1, kind: input, shape index: {}]
  %s2 = inlined_call_operand.vmem [shape: f32[1,64], index: 2, kind: input, shape index: {}]
  %s3 = inlined_call_operand.vmem [shape: bf16[192,128], index: 3, kind: input, shape index: {}]
  %s4 = inlined_call_operand.vmem [shape: f32[32,128], index: 4, kind: output, shape index: {}]
  %s5 = sld [smem:[#allocation0]]
  $region26: #{dense_connect_layer_standard.1} parent=0
    _
  %s7 = ssub.s32 1, %s5
  %s8 = scalar_select 0, %s7, %s5
  // Predicated region
  $region2: #{dense_connect_layer_standard.1} parent=0 // pred_check
    _
  $region3: #{dense_connect_layer_standard.1} parent=0 // pred_check_branch
    %10 = sbr.rel (0) target = $region5
  $region4: #{dense_connect_layer_standard.1} parent=0 // pred_region
    _
  $region5: #{dense_connect_layer_standard.1} parent=0 // pred_fallthru
    _
  // Predicated region
  $region6: #{dense_connect_layer_standard.1} parent=0 // pred_check
    _
  $region7: #{dense_connect_layer_standard.1} parent=0 // pred_check_branch
    %12 = sbr.rel (0) target = $region9
  $region8: #{dense_connect_layer_standard.1} parent=0 // pred_region
    _
  $region9: #{dense_connect_layer_standard.1} parent=0 // pred_fallthru
    _
  // Predicated region
  $region10: #{dense_connect_layer_standard.1} parent=0 // pred_check
    _
  $region11: #{dense_connect_layer_standard.1} parent=0 // pred_check_branch
    %14 = sbr.rel (0) target = $region13
  $region12: #{dense_connect_layer_standard.1} parent=0 // pred_region
    _
  $region13: #{dense_connect_layer_standard.1} parent=0 // pred_fallthru
    _
  // Predicated region
  $region14: #{dense_connect_layer_standard.1} parent=0 // pred_check
    _
  $region15: #{dense_connect_layer_standard.1} parent=0 // pred_check_branch
    %16 = sbr.rel (0) target = $region17
  $region16: #{dense_connect_layer_standard.1} parent=0 // pred_region
    _
  $region17: #{dense_connect_layer_standard.1} parent=0 // pred_fallthru
    _
  %v18 = vld [vmem:[%s0] sm:$0xff]
  %v19 = vld [vmem:[%s0 + $0x8] sm:$0xff]
  %v20 = vld [vmem:[%s0 + $0x10] sm:$0xff]
  %v21 = vld [vmem:[%s0 + $0x18] sm:$0xff]
  %v22 = vld [vmem:[%s1] sm:$0x1]
  %v24 = vperm.slane %v22, 0
  %v26 = vmul.f32 %v18, %v24
  %v27 = vmul.f32 %v19, %v24
  %v28 = vmul.f32 %v20, %v24
  %v29 = vmul.f32 %v21, %v24
  %v30 = vld [vmem:[%s2] sm:$0x1]
  %v32 = vperm.slane %v30, 0
  %v34 = vadd.f32 %v26, %v32
  %v35 = vadd.f32 %v27, %v32
  %v36 = vadd.f32 %v28, %v32
  %v37 = vadd.f32 %v29, %v32
  %v38 = vmax.f32 %v34, 0.0
  %v39 = vmax.f32 %v35, 0.0
  %v40 = vmax.f32 %v36, 0.0
  %v41 = vmax.f32 %v37, 0.0
  %44 = vrot.lane.b32.xlu0 %v38, 64
  %v45 = vpop.permute.xlu0 %44
  %46 = vrot.lane.b32.xlu0 %v39, 64
  %v47 = vpop.permute.xlu0 %46
  %vm50 = vcmask 1048064
  %51 = vst.msk [vmem:[#allocation2] sm:$0xff] %vm50, %v45
  %52 = vst.msk [vmem:[#allocation2 + $0x10] sm:$0xff] %vm50, %v47
  %vm53 = vcmask 1040384
  %v54 = vrot.slane %v38, 7
  %v55 = vrot.slane %v39, 7
  %v56 = vsel %vm53, %v54, %v55
  %vm59 = vcmask 523265
  %60 = vst.msk [vmem:[#allocation2] sm:$0xfe] %vm59, %v54
  %vm61 = vcmask 523264
  %62 = vst.msk [vmem:[#allocation2 + $0x10] sm:$0xff] %vm61, %v56
  %vm63 = vcmask 516096
  %64 = vst.msk [vmem:[#allocation2] sm:$0x1] %vm63, 0.0
  %vm65 = vcmask 1046528
  %v66 = vrot.slane %v38, 1
  %v67 = vrot.slane %v39, 1
  %v68 = vsel %vm65, %v66, %v67
  %71 = vst.msk [vmem:[#allocation2 + $0x8] sm:$0xff] %vm61, %v68
  %vm72 = vcmask 522240
  %73 = vst.msk [vmem:[#allocation2 + $0x18] sm:$0x7f] %vm72, %v67
  %74 = vst.msk [vmem:[#allocation2 + $0x1f] sm:$0x1] %vm63, 0.0
  %77 = vrot.lane.b32.xlu0 %v40, 64
  %v78 = vpop.permute.xlu0 %77
  %79 = vrot.lane.b32.xlu0 %v41, 64
  %v80 = vpop.permute.xlu0 %79
  %83 = vst.msk [vmem:[#allocation2 + $0x20] sm:$0xff] %vm50, %v78
  %84 = vst.msk [vmem:[#allocation2 + $0x30] sm:$0xff] %vm50, %v80
  %v85 = vrot.slane %v40, 7
  %v86 = vrot.slane %v41, 7
  %v87 = vsel %vm53, %v85, %v86
  %90 = vst.msk [vmem:[#allocation2 + $0x20] sm:$0xfe] %vm59, %v85
  %91 = vst.msk [vmem:[#allocation2 + $0x30] sm:$0xff] %vm61, %v87
  %92 = vst.msk [vmem:[#allocation2 + $0x20] sm:$0x1] %vm63, 0.0
  %v93 = vrot.slane %v40, 1
  %v94 = vrot.slane %v41, 1
  %v95 = vsel %vm65, %v93, %v94
  %98 = vst.msk [vmem:[#allocation2 + $0x28] sm:$0xff] %vm61, %v95
  %99 = vst.msk [vmem:[#allocation2 + $0x38] sm:$0x7f] %vm72, %v94
  %100 = vst.msk [vmem:[#allocation2 + $0x3f] sm:$0x1] %vm63, 0.0
  %v101 = vld [vmem:[#allocation2] sm:$0xff]
  %v102 = vld [vmem:[#allocation2 + $0x8] sm:$0xff]
  %v103 = vld [vmem:[#allocation2 + $0x10] sm:$0xff]
  %v104 = vld [vmem:[#allocation2 + $0x18] sm:$0xff]
  %v105 = vld [vmem:[#allocation2 + $0x20] sm:$0xff]
  %v106 = vld [vmem:[#allocation2 + $0x28] sm:$0xff]
  %v107 = vld [vmem:[#allocation2 + $0x30] sm:$0xff]
  %v108 = vld [vmem:[#allocation2 + $0x38] sm:$0xff]
  %v109 = vpack.c.bf16 %v103, %v101
  %v110 = vpack.c.bf16 %v104, %v102
  %v111 = vpack.c.bf16 %v107, %v105
  %v112 = vpack.c.bf16 %v108, %v106
  %v113 = vld [vmem:[%s3] sm:$0xf]
  %v114 = vld [vmem:[%s3 + $0x4] sm:$0xf]
  %v115 = vld [vmem:[%s3 + $0x8] sm:$0xf]
  %v116 = vld [vmem:[%s3 + $0xc] sm:$0xf]
  %v117 = vld [vmem:[%s3 + $0x10] sm:$0xf]
  %v118 = vld [vmem:[%s3 + $0x14] sm:$0xf]
  %v119 = vld [vmem:[%s3 + $0x18] sm:$0xf]
  %v120 = vld [vmem:[%s3 + $0x1c] sm:$0xf]
  %v121 = vld [vmem:[%s3 + $0x20] sm:$0xf]
  %v122 = vld [vmem:[%s3 + $0x24] sm:$0xf]
  %v123 = vld [vmem:[%s3 + $0x28] sm:$0xf]
  %v124 = vld [vmem:[%s3 + $0x2c] sm:$0xf]
  %v125 = vld [vmem:[%s3 + $0x30] sm:$0xf]
  %v126 = vld [vmem:[%s3 + $0x34] sm:$0xf]
  %v127 = vld [vmem:[%s3 + $0x38] sm:$0xf]
  %v128 = vld [vmem:[%s3 + $0x3c] sm:$0xf]
  %v129 = vld [vmem:[%s3 + $0x40] sm:$0xf]
  %v130 = vld [vmem:[%s3 + $0x44] sm:$0xf]
  %v131 = vld [vmem:[%s3 + $0x48] sm:$0xf]
  %v132 = vld [vmem:[%s3 + $0x4c] sm:$0xf]
  %v133 = vld [vmem:[%s3 + $0x50] sm:$0xf]
  %v134 = vld [vmem:[%s3 + $0x54] sm:$0xf]
  %v135 = vld [vmem:[%s3 + $0x58] sm:$0xf]
  %v136 = vld [vmem:[%s3 + $0x5c] sm:$0xf]
  %v161 = vunpack.c.l.b16 %v113
  %v162 = vunpack.c.l.b16 %v114
  %v163 = vunpack.c.l.b16 %v115
  %v164 = vunpack.c.l.b16 %v116
  %v165 = vunpack.c.l.b16 %v117
  %v166 = vunpack.c.l.b16 %v118
  %v167 = vunpack.c.l.b16 %v119
  %v168 = vunpack.c.l.b16 %v120
  %v169 = vunpack.c.l.b16 %v121
  %v170 = vunpack.c.l.b16 %v122
  %v171 = vunpack.c.l.b16 %v123
  %v172 = vunpack.c.l.b16 %v124
  %v173 = vunpack.c.l.b16 %v125
  %v174 = vunpack.c.l.b16 %v126
  %v175 = vunpack.c.l.b16 %v127
  %v176 = vunpack.c.l.b16 %v128
  %v177 = vunpack.c.l.b16 %v129
  %v178 = vunpack.c.l.b16 %v130
  %v179 = vunpack.c.l.b16 %v131
  %v180 = vunpack.c.l.b16 %v132
  %v181 = vunpack.c.l.b16 %v133
  %v182 = vunpack.c.l.b16 %v134
  %v183 = vunpack.c.l.b16 %v135
  %v184 = vunpack.c.l.b16 %v136
  %v185 = vpack.c.b16 %v162, %v161
  %v186 = vpack.c.b16 %v164, %v163
  %v187 = vpack.c.b16 %v166, %v165
  %v188 = vpack.c.b16 %v168, %v167
  %v189 = vpack.c.b16 %v170, %v169
  %v190 = vpack.c.b16 %v172, %v171
  %v191 = vpack.c.b16 %v174, %v173
  %v192 = vpack.c.b16 %v176, %v175
  %v193 = vpack.c.b16 %v178, %v177
  %v194 = vpack.c.b16 %v180, %v179
  %v195 = vpack.c.b16 %v182, %v181
  %v196 = vpack.c.b16 %v184, %v183
  %v210 = vsel %vm61, %v110, 0
  %v213 = vsel %vm61, %v112, 0
  %215 = vmatpush.bf16.msra.mxu0 %v192
  %216 = vmatpush.bf16.msra.mxu0 %v191
  %217 = vmatpush.bf16.msra.mxu0 %v190
  %218 = vmatpush.bf16.msra.mxu0 %v189
  %219 = vmatpush.bf16.msra.mxu0 %v188
  %220 = vmatpush.bf16.msra.mxu0 %v187
  %221 = vmatpush.bf16.msra.mxu0 %v186
  %222 = vmatpush.bf16.msra.mxu0 %v185
  %223 = vmatmul.bf16.gmra.mxu0 %v109
  %v224 = vpop.f32.mrf.mxu0
  %v225 = vadd.f32 0.0, %v224
  %v226 = vpop.f32.mrf.mxu0
  %v227 = vadd.f32 0.0, %v226
  %228 = vmatmul.bf16.gmra.mxu0 %v111
  %v229 = vpop.f32.mrf.mxu0
  %v230 = vadd.f32 0.0, %v229
  %v231 = vpop.f32.mrf.mxu0
  %v232 = vadd.f32 0.0, %v231
  %233 = vdwg.mxu0
  %234 = vmatpush.bf16.msra.mxu0 0
  %235 = vmatpush.bf16.msra.mxu0 0
  %236 = vmatpush.bf16.msra.mxu0 0
  %237 = vmatpush.bf16.msra.mxu0 0
  %238 = vmatpush.bf16.msra.mxu0 %v196
  %239 = vmatpush.bf16.msra.mxu0 %v195
  %240 = vmatpush.bf16.msra.mxu0 %v194
  %241 = vmatpush.bf16.msra.mxu0 %v193
  %242 = vmatmul.bf16.gmra.mxu0 %v210
  %v243 = vpop.f32.mrf.mxu0
  %v244 = vadd.f32 %v225, %v243
  %v245 = vpop.f32.mrf.mxu0
  %v246 = vadd.f32 %v227, %v245
  %247 = vmatmul.bf16.gmra.mxu0 %v213
  %v248 = vpop.f32.mrf.mxu0
  %v249 = vadd.f32 %v230, %v248
  %v250 = vpop.f32.mrf.mxu0
  %v251 = vadd.f32 %v232, %v250
  %252 = vdwg.mxu0
  %253 = vst [vmem:[%s4] sm:$0xff] %v244
  %254 = vst [vmem:[%s4 + $0x8] sm:$0xff] %v246
  %255 = vst [vmem:[%s4 + $0x10] sm:$0xff] %v249
  %256 = vst [vmem:[%s4 + $0x18] sm:$0xff] %v251
  // Predicated region
  $region18: #{dense_connect_layer_standard.1} parent=0 // pred_check
    _
  $region19: #{dense_connect_layer_standard.1} parent=0 // pred_check_branch
    %258 = sbr.rel (0) target = $region21
  $region20: #{dense_connect_layer_standard.1} parent=0 // pred_region
    _
  $region21: #{dense_connect_layer_standard.1} parent=0 // pred_fallthru
    _
  // Predicated region
  $region22: #{dense_connect_layer_standard.1} parent=0 // pred_check
    _
  $region23: #{dense_connect_layer_standard.1} parent=0 // pred_check_branch
    %260 = sbr.rel (0) target = $region25
  $region24: #{dense_connect_layer_standard.1} parent=0 // pred_region
    _
  $region25: #{dense_connect_layer_standard.1} parent=0 // pred_fallthru
    _

</llo_original>
